<compile_context>
chip_gen: v6e
topology: v6e:2x2x1
jax: 0.10.0
libtpu: 0.0.40
codegen_flags: <defaults>
</compile_context>

<pallas_src>
import jax
import jax.numpy as jnp
from jax import lax
from jax.experimental import pallas as pl
from jax.experimental.pallas import tpu as pltpu

LANE = 128  # TPU lane width; output last dim padded to a multiple of this.


def mlp_kernel(x_ref, w1_ref, b1_ref, w2_ref, b2_ref, out_ref):
    # fc1: x (TM, IN) against W1 kept in PyTorch (H, IN) layout.
    # Contract dim 1 with dim 1 -> (TM, H); transpose handled by the MXU.
    h = lax.dot_general(
        x_ref[...], w1_ref[...],
        dimension_numbers=(((1,), (1,)), ((), ())),
        preferred_element_type=jnp.float32,
    )
    h = jnp.maximum(h + b1_ref[...], 0.0)          # bias + ReLU on the VPU (fused)
    # fc2: h (TM, H) against W2 in (C_pad, H) layout -> (TM, C_pad).
    y = lax.dot_general(
        h, w2_ref[...],
        dimension_numbers=(((1,), (1,)), ((), ())),
        preferred_element_type=jnp.float32,
    )
    out_ref[...] = (y + b2_ref[...]).astype(out_ref.dtype)


def prepare_params(w1, b1, w2, b2):
    """One-time (init-time) parameter prep.

    Keeps PyTorch (out, in) weight layouts (no transposes), pads the class
    dimension to a lane-dense multiple of 128, reshapes biases to 2-D.
    Done once per model, NOT per forward call.
    """
    c, h = w2.shape
    c_pad = pl.cdiv(c, LANE) * LANE
    w2_p = jnp.zeros((c_pad, h), w2.dtype).at[:c, :].set(w2)
    b2_p = jnp.zeros((c_pad,), b2.dtype).at[:c].set(b2)
    return {
        "w1": w1,                       # (H, IN)  -- PyTorch layout, untouched
        "b1": b1.reshape(1, -1),        # (1, H)
        "w2": w2_p,                     # (C_pad, H)
        "b2": b2_p.reshape(1, -1),      # (1, C_pad)
        "num_classes": int(c),
    }


def make_forward(params, tile_m=128):
    """Returns a jitted forward: x (B, IN) f32 -> logits (B, num_classes)."""
    w1, b1_2d = params["w1"], params["b1"]
    w2_p, b2_2d = params["w2"], params["b2"]
    num_classes = params["num_classes"]
    hid, in_f = w1.shape
    c_pad = w2_p.shape[0]

    @jax.jit
    def forward(x):
        b = x.shape[0]
        # Sublane-aligned batch tile; tile over batch if it ever grows.
        # TODO(synk): at real batch sizes bump tile_m to 256 (v6e/v7x) and
        # consider bf16 operands with f32 accumulation for MXU-native throughput.
        tm = min(tile_m, max(8, pl.cdiv(b, 8) * 8))
        b_pad = pl.cdiv(b, tm) * tm
        xp = x if b_pad == b else jnp.zeros((b_pad, in_f), x.dtype).at[:b].set(x)
        grid = (b_pad // tm,)

        flops = 2 * b_pad * (in_f * hid + hid * c_pad)
        bytes_accessed = 4 * (
            b_pad * in_f + hid * in_f + hid + c_pad * hid + c_pad + b_pad * c_pad
        )

        out = pl.pallas_call(
            mlp_kernel,
            out_shape=jax.ShapeDtypeStruct((b_pad, c_pad), x.dtype),
            grid=grid,
            in_specs=[
                pl.BlockSpec((tm, in_f), lambda i: (i, 0)),     # x tile (batch-tiled)
                pl.BlockSpec((hid, in_f), lambda i: (0, 0)),    # W1 resident
                pl.BlockSpec((1, hid), lambda i: (0, 0)),       # b1 resident
                pl.BlockSpec((c_pad, hid), lambda i: (0, 0)),   # W2 resident
                pl.BlockSpec((1, c_pad), lambda i: (0, 0)),     # b2 resident
            ],
            out_specs=pl.BlockSpec((tm, c_pad), lambda i: (i, 0)),  # lane-dense store
            compiler_params=pltpu.CompilerParams(
                dimension_semantics=("parallel",),              # 2 TCs on v7x
            ),
            cost_estimate=pl.CostEstimate(
                flops=flops, transcendentals=0, bytes_accessed=bytes_accessed
            ),
        )(xp, w1, b1_2d, w2_p, b2_2d)

        return out[:b, :num_classes]

    return forward


if __name__ == "__main__":
    # Small shapes consistent with the module: batch=8, input_size=32,
    # hidden_size=64, num_classes=16.
    B, IN, HID, CLS = 8, 32, 64, 16

    key = jax.random.PRNGKey(0)
    kx, kw1, kb1, kw2, kb2 = jax.random.split(key, 5)

    x = jax.random.normal(kx, (B, IN), dtype=jnp.float32)
    # PyTorch nn.Linear weight layout: (out, in).
    w1 = jax.random.normal(kw1, (HID, IN), dtype=jnp.float32) * 0.1
    b1 = jax.random.normal(kb1, (HID,), dtype=jnp.float32) * 0.1
    w2 = jax.random.normal(kw2, (CLS, HID), dtype=jnp.float32) * 0.1
    b2 = jax.random.normal(kb2, (CLS,), dtype=jnp.float32) * 0.1

    params = prepare_params(w1, b1, w2, b2)   # one-time: pad classes, no transposes
    forward = make_forward(params)
    out = forward(x)
    jax.block_until_ready(out)

    # Reference check in plain JAX (same math as the PyTorch forward).
    ref = jnp.maximum(x @ w1.T + b1, 0.0) @ w2.T + b2
    assert out.shape == (B, CLS)
    assert jnp.allclose(out, ref, atol=1e-5, rtol=1e-5)

    print("KERNEL_OK")
</pallas_src>

<mosaic_0001>
module attributes {stable_mosaic.version = 11 : i64} {
  func.func @mlp_kernel(%arg0: i32, %arg1: memref<8x32xf32, #tpu.memory_space<vmem>>, %arg2: memref<64x32xf32, #tpu.memory_space<vmem>>, %arg3: memref<1x64xf32, #tpu.memory_space<vmem>>, %arg4: memref<128x64xf32, #tpu.memory_space<vmem>>, %arg5: memref<1x128xf32, #tpu.memory_space<vmem>>, %arg6: memref<8x128xf32, #tpu.memory_space<vmem>>) attributes {dimension_semantics = [#tpu.dimension_semantics<parallel>], iteration_bounds = array<i64: 1>, scalar_prefetch = 0 : i64, scratch_operands = 0 : i64, tpu.core_type = #tpu.core_type<tc>, window_params = [{transform_indices = @transform_0, window_bounds = array<i64: 8, 32>}, {pipeline_mode = #tpu.pipeline_mode<synchronous>, transform_indices = @transform_1, window_bounds = array<i64: 64, 32>}, {pipeline_mode = #tpu.pipeline_mode<synchronous>, transform_indices = @transform_2, window_bounds = array<i64: 1, 64>}, {pipeline_mode = #tpu.pipeline_mode<synchronous>, transform_indices = @transform_3, window_bounds = array<i64: 128, 64>}, {pipeline_mode = #tpu.pipeline_mode<synchronous>, transform_indices = @transform_4, window_bounds = array<i64: 1, 128>}, {transform_indices = @transform_5, window_bounds = array<i64: 8, 128>}]} {
    %c0 = arith.constant 0 : index
    %c0_0 = arith.constant 0 : index
    %0 = vector.load %arg1[%c0, %c0_0] : memref<8x32xf32, #tpu.memory_space<vmem>>, vector<8x32xf32>
    %c0_1 = arith.constant 0 : index
    %c0_2 = arith.constant 0 : index
    %1 = vector.load %arg2[%c0_1, %c0_2] : memref<64x32xf32, #tpu.memory_space<vmem>>, vector<64x32xf32>
    %cst = arith.constant dense<0.000000e+00> : vector<8x64xf32>
    %2 = tpu.matmul %0, %1, %cst {dimension_numbers = #tpu.dot_dimension_numbers<[1], [1], [0], [0], [0, 0, 1, 0], [], []>} : vector<8x32xf32>, vector<64x32xf32>, vector<8x64xf32> -> vector<8x64xf32>
    %c0_3 = arith.constant 0 : index
    %c0_4 = arith.constant 0 : index
    %3 = vector.load %arg3[%c0_3, %c0_4] : memref<1x64xf32, #tpu.memory_space<vmem>>, vector<1x64xf32>
    %4 = vector.broadcast %3 : vector<1x64xf32> to vector<8x64xf32>
    %5 = arith.addf %2, %4 : vector<8x64xf32>
    %cst_5 = arith.constant 0.000000e+00 : f32
    %6 = vector.broadcast %cst_5 : f32 to vector<8x64xf32>
    %7 = arith.maximumf %5, %6 : vector<8x64xf32>
    %c0_6 = arith.constant 0 : index
    %c0_7 = arith.constant 0 : index
    %8 = vector.load %arg4[%c0_6, %c0_7] : memref<128x64xf32, #tpu.memory_space<vmem>>, vector<128x64xf32>
    %cst_8 = arith.constant dense<0.000000e+00> : vector<8x128xf32>
    %9 = tpu.matmul %7, %8, %cst_8 {dimension_numbers = #tpu.dot_dimension_numbers<[1], [1], [0], [0], [0, 0, 1, 0], [], []>} : vector<8x64xf32>, vector<128x64xf32>, vector<8x128xf32> -> vector<8x128xf32>
    %c0_9 = arith.constant 0 : index
    %c0_10 = arith.constant 0 : index
    %10 = vector.load %arg5[%c0_9, %c0_10] : memref<1x128xf32, #tpu.memory_space<vmem>>, vector<1x128xf32>
    %11 = vector.broadcast %10 : vector<1x128xf32> to vector<8x128xf32>
    %12 = arith.addf %9, %11 : vector<8x128xf32>
    %c0_11 = arith.constant 0 : index
    %c0_12 = arith.constant 0 : index
    %13 = vector.load %arg6[%c0_11, %c0_12] : memref<8x128xf32, #tpu.memory_space<vmem>>, vector<8x128xf32>
    tpu.vector_store %arg6[%c0_11, %c0_12], %12 {strides = array<i32>} : memref<8x128xf32, #tpu.memory_space<vmem>>, vector<8x128xf32>,
    return
  }
  func.func @transform_0(%arg0: i32) -> (i32, i32) {
    %c0_i32 = arith.constant 0 : i32
    %c0_i32_0 = arith.constant 0 : i32
    return %arg0, %c0_i32 : i32, i32
  }
  func.func @transform_1(%arg0: i32) -> (i32, i32) {
    %c0_i32 = arith.constant 0 : i32
    %c0_i32_0 = arith.constant 0 : i32
    %c0_i32_1 = arith.constant 0 : i32
    return %c0_i32, %c0_i32_0 : i32, i32
  }
  func.func @transform_2(%arg0: i32) -> (i32, i32) {
    %c0_i32 = arith.constant 0 : i32
    %c0_i32_0 = arith.constant 0 : i32
    %c0_i32_1 = arith.constant 0 : i32
    return %c0_i32, %c0_i32_0 : i32, i32
  }
  func.func @transform_3(%arg0: i32) -> (i32, i32) {
    %c0_i32 = arith.constant 0 : i32
    %c0_i32_0 = arith.constant 0 : i32
    %c0_i32_1 = arith.constant 0 : i32
    return %c0_i32, %c0_i32_0 : i32, i32
  }
  func.func @transform_4(%arg0: i32) -> (i32, i32) {
    %c0_i32 = arith.constant 0 : i32
    %c0_i32_0 = arith.constant 0 : i32
    %c0_i32_1 = arith.constant 0 : i32
    return %c0_i32, %c0_i32_0 : i32, i32
  }
  func.func @transform_5(%arg0: i32) -> (i32, i32) {
    %c0_i32 = arith.constant 0 : i32
    %c0_i32_0 = arith.constant 0 : i32
    return %arg0, %c0_i32 : i32, i32
  }
}

</mosaic_0001>

<llo_original>
// kernel: forward.1
$region0: #{forward.1}
  #allocation0 [shape = 'u32[]', space=smem, size = 0x4, offset = 0x4, fixed_abs, tag = 'smem constant byte address 0x4 - core index']
  #allocation1 [shape = 'u32[144,128]{1,0:T(1,128)}', space=vmem, size = 0x12000, scoped, tag = 'internal scratch']
  %s0 = inlined_call_operand.hbm [shape: f32[8,32], index: 0, kind: input, shape index: {}]
  %s1 = inlined_call_operand.hbm [shape: f32[64,32], index: 1, kind: input, shape index: {}]
  %s2 = inlined_call_operand.vmem [shape: f32[1,64], index: 2, kind: input, shape index: {}]
  %s3 = inlined_call_operand.hbm [shape: f32[128,64], index: 3, kind: input, shape index: {}]
  %s4 = inlined_call_operand.vmem [shape: f32[1,128], index: 4, kind: input, shape index: {}]
  %s5 = inlined_call_operand.hbm [shape: f32[8,128], index: 5, kind: output, shape index: {}]
  %s6 = sld [smem:[#allocation0]]
  $region42: #{forward.1} parent=0
    _
  %s8 = ssub.s32 1, %s6
  %s9 = scalar_select 0, %s8, %s6
  $region1: #{forward.1} parent=0
    #allocation2 [shape = 'u8[4096]{0}', space=vmem, size = 0x1000, scoped, tag = 'input window, operand 0, single buffered']
    #allocation3 [shape = 's32[1]{0}', space=sflag, size = 0x4, scoped, tag = 'scoped memory for forward.1']
    #allocation4 [shape = 's32[1]{0}', space=sflag, size = 0x4, scoped, tag = 'scoped memory for forward.1']
    #allocation5 [shape = 'u8[32768]{0}', space=vmem, size = 0x8000, scoped, tag = 'input window, operand 1, single buffered']
    #allocation6 [shape = 's32[1]{0}', space=sflag, size = 0x4, scoped, tag = 'scoped memory for forward.1']
    #allocation7 [shape = 'u8[65536]{0}', space=vmem, size = 0x10000, scoped, tag = 'input window, operand 3, single buffered']
    #allocation8 [shape = 'u8[4096]{0}', space=vmem, size = 0x1000, scoped, tag = 'output window, operand 0, single buffered']
    %10 = vsyncpa [#allocation3], 0
    %11 = vsyncpa [#allocation6], 0
    %12 = vsyncpa [#allocation4], 0
    // Predicated region
    $region2: #{forward.1} parent=1 // pred_check
      _
    $region3: #{forward.1} parent=1 // pred_check_branch
      %14 = sbr.rel (0) target = $region5
    $region4: #{forward.1} parent=1 // pred_region
      %s16 = ssub.s32 128, 128
      %17 = vsyncadd [#allocation3], %s16
      %s19 = sshll.u32 [#allocation2], 4
      %s20 = int_to_ptr.vmem [resolvable:$true] %s19
      %22 = dma.hbm_to_vmem [thread:$0]  %s0, 128, %s20, [#allocation3]
    $region5: #{forward.1} parent=1 // pred_fallthru
      _
    // Predicated region
    $region6: #{forward.1} parent=1 // pred_check
      _
    $region7: #{forward.1} parent=1 // pred_check_branch
      %24 = sbr.rel (0) target = $region9
    $region8: #{forward.1} parent=1 // pred_region
      %s26 = ssub.s32 1024, 1024
      %27 = vsyncadd [#allocation6], %s26
      %s28 = sshll.u32 [#allocation5], 4
      %s29 = int_to_ptr.vmem [resolvable:$true] %s28
      %34 = dma.hbm_to_vmem [thread:$0]  %s1, 1024, %s29, [#allocation6], 128, 128, 8
    $region9: #{forward.1} parent=1 // pred_fallthru
      _
    // Predicated region
    $region10: #{forward.1} parent=1 // pred_check
      _
    $region11: #{forward.1} parent=1 // pred_check_branch
      %36 = sbr.rel (0) target = $region13
    $region12: #{forward.1} parent=1 // pred_region
      _
    $region13: #{forward.1} parent=1 // pred_fallthru
      _
    // Predicated region
    $region14: #{forward.1} parent=1 // pred_check
      _
    $region15: #{forward.1} parent=1 // pred_check_branch
      %38 = sbr.rel (0) target = $region17
    $region16: #{forward.1} parent=1 // pred_region
      %s40 = ssub.s32 2048, 2048
      %41 = vsyncadd [#allocation6], %s40
      %s42 = sshll.u32 [#allocation7], 4
      %s43 = int_to_ptr.vmem [resolvable:$true] %s42
      %48 = dma.hbm_to_vmem [thread:$0]  %s3, 2048, %s43, [#allocation6], 128, 128, 8
    $region17: #{forward.1} parent=1 // pred_fallthru
      _
    // Predicated region
    $region18: #{forward.1} parent=1 // pred_check
      _
    $region19: #{forward.1} parent=1 // pred_check_branch
      %50 = sbr.rel (0) target = $region21
    $region20: #{forward.1} parent=1 // pred_region
      _
    $region21: #{forward.1} parent=1 // pred_fallthru
      _
    // Predicated region
    $region22: #{forward.1} parent=1 // pred_check
      _
    $region23: #{forward.1} parent=1 // pred_check_branch
      %52 = sbr.rel (0) target = $region25
    $region24: #{forward.1} parent=1 // pred_region
      %53 = dma.done [#allocation3], 128
    $region25: #{forward.1} parent=1 // pred_fallthru
      _
    // Predicated region
    $region26: #{forward.1} parent=1 // pred_check
      _
    $region27: #{forward.1} parent=1 // pred_check_branch
      %55 = sbr.rel (0) target = $region29
    $region28: #{forward.1} parent=1 // pred_region
      %56 = dma.done [#allocation6], 1024
    $region29: #{forward.1} parent=1 // pred_fallthru
      _
    // Predicated region
    $region30: #{forward.1} parent=1 // pred_check
      _
    $region31: #{forward.1} parent=1 // pred_check_branch
      %58 = sbr.rel (0) target = $region33
    $region32: #{forward.1} parent=1 // pred_region
      %59 = dma.done [#allocation6], 2048
    $region33: #{forward.1} parent=1 // pred_fallthru
      _
    %v60 = vld [vmem:[#allocation2] sm:$0xff]
    %v61 = vld [vmem:[#allocation5] sm:$0xff]
    %v62 = vld [vmem:[#allocation5 + $0x8] sm:$0xff]
    %v63 = vld [vmem:[#allocation5 + $0x10] sm:$0xff]
    %v64 = vld [vmem:[#allocation5 + $0x18] sm:$0xff]
    %v65 = vld [vmem:[#allocation5 + $0x20] sm:$0xff]
    %v66 = vld [vmem:[#allocation5 + $0x28] sm:$0xff]
    %v67 = vld [vmem:[#allocation5 + $0x30] sm:$0xff]
    %v68 = vld [vmem:[#allocation5 + $0x38] sm:$0xff]
    %v69 = vld [vmem:[%s2] sm:$0x1]
    %v71 = vlaneseq
    %v72 = vshrl.u32 %v71, 7
    %v73 = vsub.s32 0, %v72
    %v74 = vrot.slane %v69, %v73
    %vm76 = vcmask 261120
    %v78 = vsel %vm76, %v60, 0
    %v81 = vsel %vm76, %v61, 0
    %v84 = vsel %vm76, %v62, 0
    %v87 = vsel %vm76, %v63, 0
    %v90 = vsel %vm76, %v64, 0
    %v93 = vsel %vm76, %v65, 0
    %v96 = vsel %vm76, %v66, 0
    %v99 = vsel %vm76, %v67, 0
    %v102 = vsel %vm76, %v68, 0
    %104 = vmatprep.subr.mxu0 0.0
    %105 = vmatpush1.xpose.msra.mxu0 0.0
    %106 = vmatprep.subr.mxu0 0.0
    %107 = vmatpush1.xpose.msra.mxu0 0.0
    %108 = vmatprep.subr.mxu0 0.0
    %109 = vmatpush1.xpose.msra.mxu0 0.0
    %110 = vmatprep.subr.mxu0 0.0
    %111 = vmatpush1.xpose.msra.mxu0 0.0
    %112 = vmatprep.subr.mxu0 0.0
    %113 = vmatpush1.xpose.msra.mxu0 0.0
    %114 = vmatprep.subr.mxu0 0.0
    %115 = vmatpush1.xpose.msra.mxu0 0.0
    %116 = vmatprep.subr.mxu0 0.0
    %117 = vmatpush1.xpose.msra.mxu0 0.0
    %118 = vmatprep.subr.mxu0 0.0
    %119 = vmatpush1.xpose.msra.mxu0 0.0
    %120 = vmatprep.subr.mxu0 0.0
    %121 = vmatpush1.xpose.msra.mxu0 %v102
    %122 = vmatprep.subr.mxu0 0.0
    %123 = vmatpush1.xpose.msra.mxu0 %v99
    %124 = vmatprep.subr.mxu0 0.0
    %125 = vmatpush1.xpose.msra.mxu0 %v96
    %126 = vmatprep.subr.mxu0 0.0
    %127 = vmatpush1.xpose.msra.mxu0 %v93
    %128 = vmatprep.subr.mxu0 0.0
    %129 = vmatpush1.xpose.msra.mxu0 %v90
    %130 = vmatprep.subr.mxu0 0.0
    %131 = vmatpush1.xpose.msra.mxu0 %v87
    %132 = vmatprep.subr.mxu0 0.0
    %133 = vmatpush1.xpose.msra.mxu0 %v84
    %134 = vmatprep.subr.mxu0 0.0
    %135 = vmatpush1.xpose.msra.mxu0 %v81
    %136 = vmatprep.subr.mxu0 0.0
    %137 = vmatpush2.xpose.msra.mxu0 0.0
    %138 = vmatprep.subr.mxu0 0.0
    %139 = vmatpush2.xpose.msra.mxu0 0.0
    %140 = vmatprep.subr.mxu0 0.0
    %141 = vmatpush2.xpose.msra.mxu0 0.0
    %142 = vmatprep.subr.mxu0 0.0
    %143 = vmatpush2.xpose.msra.mxu0 0.0
    %144 = vmatprep.subr.mxu0 0.0
    %145 = vmatpush2.xpose.msra.mxu0 0.0
    %146 = vmatprep.subr.mxu0 0.0
    %147 = vmatpush2.xpose.msra.mxu0 0.0
    %148 = vmatprep.subr.mxu0 0.0
    %149 = vmatpush2.xpose.msra.mxu0 0.0
    %150 = vmatprep.subr.mxu0 0.0
    %151 = vmatpush2.xpose.msra.mxu0 0.0
    %152 = vmatprep.subr.mxu0 0.0
    %153 = vmatpush2.xpose.msra.mxu0 0.0
    %154 = vmatprep.subr.mxu0 0.0
    %155 = vmatpush2.xpose.msra.mxu0 0.0
    %156 = vmatprep.subr.mxu0 0.0
    %157 = vmatpush2.xpose.msra.mxu0 0.0
    %158 = vmatprep.subr.mxu0 0.0
    %159 = vmatpush2.xpose.msra.mxu0 0.0
    %160 = vmatprep.subr.mxu0 0.0
    %161 = vmatpush2.xpose.msra.mxu0 0.0
    %162 = vmatprep.subr.mxu0 0.0
    %163 = vmatpush2.xpose.msra.mxu0 0.0
    %164 = vmatprep.subr.mxu0 0.0
    %165 = vmatpush2.xpose.msra.mxu0 0.0
    %166 = vmatprep.subr.mxu0 0.0
    %167 = vmatpush2.xpose.msra.mxu0 0.0
    %168 = vmatprep.mubr.f32.mxu0 0.0
    %169 = vmatmul.mubr.f32.gmra.mxu0 %v78
    %v170 = vpop.f32.mrf.mxu0
    %v171 = vadd.f32 %v74, %v170
    %v172 = vpop.f32.mrf.mxu0
    %173 = vdwg.mxu0
    %v174 = vmax.f32 %v171, 0.0
    %v175 = vld [vmem:[#allocation7] sm:$0xff]
    %v176 = vld [vmem:[#allocation7 + $0x8] sm:$0xff]
    %v177 = vld [vmem:[#allocation7 + $0x10] sm:$0xff]
    %v178 = vld [vmem:[#allocation7 + $0x18] sm:$0xff]
    %v179 = vld [vmem:[#allocation7 + $0x20] sm:$0xff]
    %v180 = vld [vmem:[#allocation7 + $0x28] sm:$0xff]
    %v181 = vld [vmem:[#allocation7 + $0x30] sm:$0xff]
    %v182 = vld [vmem:[#allocation7 + $0x38] sm:$0xff]
    %v183 = vld [vmem:[#allocation7 + $0x40] sm:$0xff]
    %v184 = vld [vmem:[#allocation7 + $0x48] sm:$0xff]
    %v185 = vld [vmem:[#allocation7 + $0x50] sm:$0xff]
    %v186 = vld [vmem:[#allocation7 + $0x58] sm:$0xff]
    %v187 = vld [vmem:[#allocation7 + $0x60] sm:$0xff]
    %v188 = vld [vmem:[#allocation7 + $0x68] sm:$0xff]
    %v189 = vld [vmem:[#allocation7 + $0x70] sm:$0xff]
    %v190 = vld [vmem:[#allocation7 + $0x78] sm:$0xff]
    %v191 = vld [vmem:[%s4] sm:$0x1]
    %v193 = vlaneseq
    %v194 = vshrl.u32 %v193, 7
    %v195 = vsub.s32 0, %v194
    %v196 = vrot.slane %v191, %v195
    %vm198 = vcmask 523264
    %v200 = vsel %vm198, %v174, 0
    %v203 = vsel %vm198, %v175, 0
    %v206 = vsel %vm198, %v176, 0
    %v209 = vsel %vm198, %v177, 0
    %v212 = vsel %vm198, %v178, 0
    %v215 = vsel %vm198, %v179, 0
    %v218 = vsel %vm198, %v180, 0
    %v221 = vsel %vm198, %v181, 0
    %v224 = vsel %vm198, %v182, 0
    %v227 = vsel %vm198, %v183, 0
    %v230 = vsel %vm198, %v184, 0
    %v233 = vsel %vm198, %v185, 0
    %v236 = vsel %vm198, %v186, 0
    %v239 = vsel %vm198, %v187, 0
    %v242 = vsel %vm198, %v188, 0
    %v245 = vsel %vm198, %v189, 0
    %v248 = vsel %vm198, %v190, 0
    %250 = vmatprep.subr.mxu0 0.0
    %251 = vmatpush1.xpose.msra.mxu0 %v248
    %252 = vmatprep.subr.mxu0 0.0
    %253 = vmatpush1.xpose.msra.mxu0 %v245
    %254 = vmatprep.subr.mxu0 0.0
    %255 = vmatpush1.xpose.msra.mxu0 %v242
    %256 = vmatprep.subr.mxu0 0.0
    %257 = vmatpush1.xpose.msra.mxu0 %v239
    %258 = vmatprep.subr.mxu0 0.0
    %259 = vmatpush1.xpose.msra.mxu0 %v236
    %260 = vmatprep.subr.mxu0 0.0
    %261 = vmatpush1.xpose.msra.mxu0 %v233
    %262 = vmatprep.subr.mxu0 0.0
    %263 = vmatpush1.xpose.msra.mxu0 %v230
    %264 = vmatprep.subr.mxu0 0.0
    %265 = vmatpush1.xpose.msra.mxu0 %v227
    %266 = vmatprep.subr.mxu0 0.0
    %267 = vmatpush1.xpose.msra.mxu0 %v224
    %268 = vmatprep.subr.mxu0 0.0
    %269 = vmatpush1.xpose.msra.mxu0 %v221
    %270 = vmatprep.subr.mxu0 0.0
    %271 = vmatpush1.xpose.msra.mxu0 %v218
    %272 = vmatprep.subr.mxu0 0.0
    %273 = vmatpush1.xpose.msra.mxu0 %v215
    %274 = vmatprep.subr.mxu0 0.0
    %275 = vmatpush1.xpose.msra.mxu0 %v212
    %276 = vmatprep.subr.mxu0 0.0
    %277 = vmatpush1.xpose.msra.mxu0 %v209
    %278 = vmatprep.subr.mxu0 0.0
    %279 = vmatpush1.xpose.msra.mxu0 %v206
    %280 = vmatprep.subr.mxu0 0.0
    %281 = vmatpush1.xpose.msra.mxu0 %v203
    %282 = vmatprep.subr.mxu0 0.0
    %283 = vmatpush2.xpose.msra.mxu0 0.0
    %284 = vmatprep.subr.mxu0 0.0
    %285 = vmatpush2.xpose.msra.mxu0 0.0
    %286 = vmatprep.subr.mxu0 0.0
    %287 = vmatpush2.xpose.msra.mxu0 0.0
    %288 = vmatprep.subr.mxu0 0.0
    %289 = vmatpush2.xpose.msra.mxu0 0.0
    %290 = vmatprep.subr.mxu0 0.0
    %291 = vmatpush2.xpose.msra.mxu0 0.0
    %292 = vmatprep.subr.mxu0 0.0
    %293 = vmatpush2.xpose.msra.mxu0 0.0
    %294 = vmatprep.subr.mxu0 0.0
    %295 = vmatpush2.xpose.msra.mxu0 0.0
    %296 = vmatprep.subr.mxu0 0.0
    %297 = vmatpush2.xpose.msra.mxu0 0.0
    %298 = vmatprep.subr.mxu0 0.0
    %299 = vmatpush2.xpose.msra.mxu0 0.0
    %300 = vmatprep.subr.mxu0 0.0
    %301 = vmatpush2.xpose.msra.mxu0 0.0
    %302 = vmatprep.subr.mxu0 0.0
    %303 = vmatpush2.xpose.msra.mxu0 0.0
    %304 = vmatprep.subr.mxu0 0.0
    %305 = vmatpush2.xpose.msra.mxu0 0.0
    %306 = vmatprep.subr.mxu0 0.0
    %307 = vmatpush2.xpose.msra.mxu0 0.0
    %308 = vmatprep.subr.mxu0 0.0
    %309 = vmatpush2.xpose.msra.mxu0 0.0
    %310 = vmatprep.subr.mxu0 0.0
    %311 = vmatpush2.xpose.msra.mxu0 0.0
    %312 = vmatprep.subr.mxu0 0.0
    %313 = vmatpush2.xpose.msra.mxu0 0.0
    %314 = vmatprep.mubr.f32.mxu0 0.0
    %315 = vmatmul.mubr.f32.gmra.mxu0 %v200
    %v316 = vpop.f32.mrf.mxu0
    %v317 = vadd.f32 %v196, %v316
    %v318 = vpop.f32.mrf.mxu0
    %319 = vdwg.mxu0
    %320 = vst [vmem:[#allocation8] sm:$0xff] %v317
    // Predicated region
    $region34: #{forward.1} parent=1 // pred_check
      _
    $region35: #{forward.1} parent=1 // pred_check_branch
      %322 = sbr.rel (0) target = $region37
    $region36: #{forward.1} parent=1 // pred_region
      %s324 = ssub.s32 128, 128
      %325 = vsyncadd [#allocation4], %s324
      %s327 = sshll.u32 [#allocation8], 4
      %s328 = int_to_ptr.vmem [resolvable:$true] %s327
      %330 = dma.vmem_to_hbm [thread:$0]  %s328, 128, %s5, [#allocation4]
    $region37: #{forward.1} parent=1 // pred_fallthru
      _
    // Predicated region
    $region38: #{forward.1} parent=1 // pred_check
      _
    $region39: #{forward.1} parent=1 // pred_check_branch
      %332 = sbr.rel (0) target = $region41
    $region40: #{forward.1} parent=1 // pred_region
      %333 = dma.done [#allocation4], 128
    $region41: #{forward.1} parent=1 // pred_fallthru
      _
    %334 = vsyncpa [#allocation3], 1
    %335 = vsyncpa [#allocation6], 1
    %336 = vsyncpa [#allocation4], 1

</llo_original>
